<compile_context>
chip_gen: v6e
topology: v6e:2x2x1
jax: 0.10.0
libtpu: 0.0.40
codegen_flags: <defaults>
</compile_context>

<pallas_src>
import jax
import jax.numpy as jnp
from jax import lax
from jax.experimental import pallas as pl
from jax.experimental.pallas import tpu as pltpu

CLIP_MEAN = (0.48145466, 0.4578275, 0.40821073)
CLIP_STD = (0.26862954, 0.26130258, 0.27577711)
HIGH = lax.Precision.HIGHEST


def _round_up(x, m):
    return ((x + m - 1) // m) * m


# ------------------------------------------------------------------- kernel --

def _fused_forward_kernel(x_ref, we_ref, be_ref, wh_ref, bh_ref, head_ref, acc_ref):
    """One (batch-tile i, K-tile k) grid step.

    Partial features accumulate in f32 VMEM scratch across the K ("arbitrary")
    axis; the collapsed PCBM-hybrid head matmul + bias adds run once, at the
    last K step, writing a lane-dense (tm, NP) output slab (unmasked stores).
    """
    k = pl.program_id(1)

    @pl.when(k == 0)
    def _():
        acc_ref[...] = jnp.zeros_like(acc_ref)

    # partial features: x_tile (tm, tk) @ w_enc_tile (tk, DP), bf16 MXU, f32 acc
    acc_ref[...] += jnp.dot(
        x_ref[...], we_ref[...], preferred_element_type=jnp.float32
    )

    @pl.when(k == pl.num_programs(1) - 1)
    def _():
        feats = acc_ref[...] + be_ref[...]                       # f32 features
        head_ref[...] = (
            jnp.dot(feats.astype(wh_ref.dtype), wh_ref[...],
                    preferred_element_type=jnp.float32)
            + bh_ref[...]
        )


# --------------------------------------------------------------- param prep --

def fold_params(params, image_shape, compute_dtype=jnp.bfloat16):
    """Fold CLIP Normalize into the encoder, collapse the PCBM-hybrid head,
    zero-pad everything lane/sublane dense, and cast streamed weights to bf16.

    Returns only array leaves (safe to pass through jit); concept/class counts
    are static args of the forward.
    """
    _, C, H, W = image_shape
    w_enc = params["w_enc"].astype(jnp.float32)           # (K, D)
    b_enc = params["b_enc"].astype(jnp.float32)           # (1, D)
    concept_w = params["concept_w"].astype(jnp.float32)   # (D, NC)
    concept_b = params["concept_b"].astype(jnp.float32)   # (1, NC)
    cls_w = params["cls_w"].astype(jnp.float32)           # (NC, NCLS)
    res_w = params["res_w"].astype(jnp.float32)           # (D, NCLS)
    cls_b = params["cls_b"].astype(jnp.float32)           # (1, NCLS)

    K, D = w_enc.shape
    n_concepts = concept_w.shape[1]
    n_classes = cls_w.shape[1]

    # (x - mean) / std == x * inv_std - mean * inv_std  (per-channel affine),
    # folded into the linear encoder (NCHW channel-major flatten):
    #   w' = w_enc * inv_std_per_row ; b' = b_enc - (mean*inv_std)_flat @ w_enc
    inv_std = 1.0 / jnp.asarray(CLIP_STD, jnp.float32)
    mean = jnp.asarray(CLIP_MEAN, jnp.float32)
    scale_flat = jnp.repeat(inv_std, H * W)                # (K,)
    shift_flat = jnp.repeat(mean * inv_std, H * W)         # (K,)
    w_enc_f = w_enc * scale_flat[:, None]
    b_enc_f = b_enc - jnp.dot(shift_flat[None, :], w_enc, precision=HIGH)

    # out = dist@cls_W + f@res_W + cls_b, dist = f@concept_W + concept_b
    #     = f @ (concept_W@cls_W + res_W) + (concept_b@cls_W + cls_b)
    w_out = jnp.dot(concept_w, cls_w, precision=HIGH) + res_w      # (D, NCLS)
    b_out = jnp.dot(concept_b, cls_w, precision=HIGH) + cls_b      # (1, NCLS)
    w_head = jnp.concatenate([concept_w, w_out], axis=1)           # (D, NC+NCLS)
    b_head = jnp.concatenate([concept_b, b_out], axis=1)           # (1, NC+NCLS)

    # Lane/sublane-dense zero padding (exact: padded rows/cols are zero).
    KP = _round_up(K, 128)                         # reduction dim (lane dim of x)
    DP = _round_up(D, 128)                         # feature dim
    NP = _round_up(n_concepts + n_classes, 128)    # output slab

    w_enc_f = jnp.pad(w_enc_f, ((0, KP - K), (0, DP - D)))
    b_enc_f = jnp.pad(b_enc_f, ((0, 0), (0, DP - D)))
    w_head = jnp.pad(w_head, ((0, DP - D), (0, NP - (n_concepts + n_classes))))
    b_head = jnp.pad(b_head, ((0, 0), (0, NP - (n_concepts + n_classes))))

    return {
        "w_enc_f": w_enc_f.astype(compute_dtype),   # streamed, bf16
        "b_enc_f": b_enc_f,                          # resident, f32
        "w_head": w_head.astype(compute_dtype),      # resident, bf16
        "b_head": b_head,                            # resident, f32
    }


# ------------------------------------------------------------------ forward --

def model_wrapper_forward(images, folded, n_concepts, n_classes,
                          max_tk=2048, tile_m=128):
    B, C, H, W = images.shape
    K = C * H * W

    w_enc_f = folded["w_enc_f"]
    b_enc_f = folded["b_enc_f"]
    w_head = folded["w_head"]
    b_head = folded["b_head"]
    KP, DP = w_enc_f.shape
    NP = w_head.shape[1]

    # Batch tiling: sublane-dense rows, "parallel" grid axis (both v7x TCs).
    tm = min(_round_up(B, 8), tile_m)
    BP = _round_up(B, tm)

    # K tiling: largest multiple of 128 that divides KP and is <= max_tk.
    # max_tk=2048 keeps the double-buffered bf16 w_enc tile well inside the
    # v7x 64 MiB VMEM budget (and is comfortably fine on v5e/v6e).
    tk = 128
    t = 128
    while t <= min(max_tk, KP):
        if KP % t == 0:
            tk = t
        t += 128
    grid = (BP // tm, KP // tk)

    # lane-dense flatten + zero padding; raw pixels cast to the streaming dtype
    # (Normalize is already folded into w_enc_f / b_enc_f).
    x_flat = images.astype(jnp.float32).reshape(B, K)
    x_flat = jnp.pad(x_flat, ((0, BP - B), (0, KP - K))).astype(w_enc_f.dtype)

    head = pl.pallas_call(
        _fused_forward_kernel,
        out_shape=jax.ShapeDtypeStruct((BP, NP), jnp.float32),
        grid_spec=pltpu.PrefetchScalarGridSpec(
            num_scalar_prefetch=0,
            grid=grid,
            in_specs=[
                pl.BlockSpec((tm, tk), lambda i, k: (i, k)),   # pixels (streamed)
                pl.BlockSpec((tk, DP), lambda i, k: (k, 0)),   # folded encoder (streamed)
                pl.BlockSpec((1, DP), lambda i, k: (0, 0)),    # encoder bias (resident)
                pl.BlockSpec((DP, NP), lambda i, k: (0, 0)),   # collapsed head (resident)
                pl.BlockSpec((1, NP), lambda i, k: (0, 0)),    # head bias (resident)
            ],
            out_specs=pl.BlockSpec((tm, NP), lambda i, k: (i, 0)),
            scratch_shapes=[pltpu.VMEM((tm, DP), jnp.float32)],  # feature accumulator
        ),
        compiler_params=pltpu.CompilerParams(
            dimension_semantics=("parallel", "arbitrary"),
            vmem_limit_bytes=48 * 1024 * 1024,
        ),
    )(x_flat, w_enc_f, b_enc_f, w_head, b_head)

    x_dist = head[:B, :n_concepts]                       # concept distances
    out = head[:B, n_concepts:n_concepts + n_classes]    # logits
    return out, x_dist


# -------------------------------------------------------- pure-JAX reference --

def reference_forward(images, params):
    B, C, H, W = images.shape
    mean = jnp.asarray(CLIP_MEAN, jnp.float32).reshape(1, C, 1, 1)
    std = jnp.asarray(CLIP_STD, jnp.float32).reshape(1, C, 1, 1)
    x = (images.astype(jnp.float32) - mean) / std
    f = jnp.dot(x.reshape(B, -1), params["w_enc"], precision=HIGH) + params["b_enc"]
    dist = jnp.dot(f, params["concept_w"], precision=HIGH) + params["concept_b"]
    out = (jnp.dot(dist, params["cls_w"], precision=HIGH)
           + jnp.dot(f, params["res_w"], precision=HIGH)
           + params["cls_b"])
    return out, dist


# --------------------------------------------------------------------- main --

if __name__ == "__main__":
    # Small shapes consistent with the forward pass; B=18 / tile_m=8 / max_tk=256
    # exercise both grid axes (3 batch tiles x 3 K tiles), the f32 accumulator,
    # and the batch/lane padding paths.
    B, C, H, W = 18, 3, 16, 16      # RGB images (resolution scaled down from 224)
    D = 32                          # CLIP feature dim (synthetic)
    N_CONCEPTS = 16                 # PCBM concept bank size
    N_CLASSES = 10                  # CIFAR-10

    key = jax.random.PRNGKey(0)
    k_img, k_enc, k_cw, k_cls, k_res = jax.random.split(key, 5)

    images = jax.random.uniform(k_img, (B, C, H, W), jnp.float32)

    K = C * H * W
    params = {
        "w_enc":     jax.random.normal(k_enc, (K, D), jnp.float32) * 0.02,
        "b_enc":     jnp.zeros((1, D), jnp.float32),
        "concept_w": jax.random.normal(k_cw, (D, N_CONCEPTS), jnp.float32) * 0.1,
        "concept_b": jnp.zeros((1, N_CONCEPTS), jnp.float32),
        "cls_w":     jax.random.normal(k_cls, (N_CONCEPTS, N_CLASSES), jnp.float32) * 0.1,
        "res_w":     jax.random.normal(k_res, (D, N_CLASSES), jnp.float32) * 0.01,
        "cls_b":     jnp.zeros((1, N_CLASSES), jnp.float32),
    }

    folded = fold_params(params, images.shape)           # one-time param prep

    fwd = jax.jit(model_wrapper_forward, static_argnums=(2, 3, 4, 5))
    out, x = fwd(images, folded, N_CONCEPTS, N_CLASSES, 256, 8)
    jax.block_until_ready((out, x))

    assert out.shape == (B, N_CLASSES) and x.shape == (B, N_CONCEPTS)
    assert out.dtype == jnp.float32 and x.dtype == jnp.float32

    # Tolerance check vs the unfused f32 HIGHEST reference.  The fused path
    # streams weights/pixels in bf16 (f32 accumulation), so allow ~1e-2; the
    # algebraic folding itself is exact.
    out_ref, x_ref = reference_forward(images, params)
    assert jnp.allclose(out, out_ref, rtol=1e-2, atol=1e-2), "logits mismatch"
    assert jnp.allclose(x, x_ref, rtol=1e-2, atol=1e-2), "concept dist mismatch"

    print("KERNEL_OK")
</pallas_src>

<mosaic_0001>
module attributes {stable_mosaic.version = 11 : i64} {
  func.func @_fused_forward_kernel(%arg0: i32, %arg1: i32, %arg2: memref<8x256xbf16, #tpu.memory_space<vmem>>, %arg3: memref<256x128xbf16, #tpu.memory_space<vmem>>, %arg4: memref<1x128xf32, #tpu.memory_space<vmem>>, %arg5: memref<128x128xbf16, #tpu.memory_space<vmem>>, %arg6: memref<1x128xf32, #tpu.memory_space<vmem>>, %arg7: memref<8x128xf32, #tpu.memory_space<vmem>>, %arg8: memref<8x128xf32, #tpu.memory_space<vmem>>) attributes {dimension_semantics = [#tpu.dimension_semantics<parallel>, #tpu.dimension_semantics<arbitrary>], iteration_bounds = array<i64: 3, 3>, scalar_prefetch = 0 : i64, scratch_operands = 1 : i64, tpu.core_type = #tpu.core_type<tc>, window_params = [{transform_indices = @transform_0, window_bounds = array<i64: 8, 256>}, {transform_indices = @transform_1, window_bounds = array<i64: 256, 128>}, {pipeline_mode = #tpu.pipeline_mode<synchronous>, transform_indices = @transform_2, window_bounds = array<i64: 1, 128>}, {pipeline_mode = #tpu.pipeline_mode<synchronous>, transform_indices = @transform_3, window_bounds = array<i64: 128, 128>}, {pipeline_mode = #tpu.pipeline_mode<synchronous>, transform_indices = @transform_4, window_bounds = array<i64: 1, 128>}, {transform_indices = @transform_5, window_bounds = array<i64: 8, 128>}]} {
    %c0_i32 = arith.constant 0 : i32
    %0 = arith.cmpi eq, %arg1, %c0_i32 : i32
    %1 = arith.extui %0 : i1 to i32
    %c0_i32_0 = arith.constant 0 : i32
    %2 = arith.cmpi ne, %1, %c0_i32_0 : i32
    scf.if %2 {
      %cst_9 = arith.constant 0.000000e+00 : f32
      %12 = vector.broadcast %cst_9 : f32 to vector<8x128xf32>
      %c0_10 = arith.constant 0 : index
      %c0_11 = arith.constant 0 : index
      %13 = vector.load %arg8[%c0_10, %c0_11] : memref<8x128xf32, #tpu.memory_space<vmem>>, vector<8x128xf32>
      tpu.vector_store %arg8[%c0_10, %c0_11], %12 {strides = array<i32>} : memref<8x128xf32, #tpu.memory_space<vmem>>, vector<8x128xf32>,
    } else {
    }
    %c0 = arith.constant 0 : index
    %c0_1 = arith.constant 0 : index
    %3 = vector.load %arg8[%c0, %c0_1] : memref<8x128xf32, #tpu.memory_space<vmem>>, vector<8x128xf32>
    %c0_2 = arith.constant 0 : index
    %c0_3 = arith.constant 0 : index
    %4 = vector.load %arg2[%c0_2, %c0_3] : memref<8x256xbf16, #tpu.memory_space<vmem>>, vector<8x256xbf16>
    %c0_4 = arith.constant 0 : index
    %c0_5 = arith.constant 0 : index
    %5 = vector.load %arg3[%c0_4, %c0_5] : memref<256x128xbf16, #tpu.memory_space<vmem>>, vector<256x128xbf16>
    %cst = arith.constant dense<0.000000e+00> : vector<8x128xf32>
    %6 = tpu.matmul %4, %5, %cst {dimension_numbers = #tpu.dot_dimension_numbers<[1], [0], [0], [1], [0, 0, 1, 1], [], []>} : vector<8x256xbf16>, vector<256x128xbf16>, vector<8x128xf32> -> vector<8x128xf32>
    %7 = arith.addf %3, %6 : vector<8x128xf32>
    %c0_6 = arith.constant 0 : index
    %c0_7 = arith.constant 0 : index
    %8 = vector.load %arg8[%c0_6, %c0_7] : memref<8x128xf32, #tpu.memory_space<vmem>>, vector<8x128xf32>
    tpu.vector_store %arg8[%c0_6, %c0_7], %7 {strides = array<i32>} : memref<8x128xf32, #tpu.memory_space<vmem>>, vector<8x128xf32>,
    %c2_i32 = arith.constant 2 : i32
    %9 = arith.cmpi eq, %arg1, %c2_i32 : i32
    %10 = arith.extui %9 : i1 to i32
    %c0_i32_8 = arith.constant 0 : i32
    %11 = arith.cmpi ne, %10, %c0_i32_8 : i32
    scf.if %11 {
      %c0_9 = arith.constant 0 : index
      %c0_10 = arith.constant 0 : index
      %12 = vector.load %arg8[%c0_9, %c0_10] : memref<8x128xf32, #tpu.memory_space<vmem>>, vector<8x128xf32>
      %c0_11 = arith.constant 0 : index
      %c0_12 = arith.constant 0 : index
      %13 = vector.load %arg4[%c0_11, %c0_12] : memref<1x128xf32, #tpu.memory_space<vmem>>, vector<1x128xf32>
      %14 = vector.broadcast %13 : vector<1x128xf32> to vector<8x128xf32>
      %15 = arith.addf %12, %14 : vector<8x128xf32>
      %16 = arith.truncf %15 : vector<8x128xf32> to vector<8x128xbf16>
      %c0_13 = arith.constant 0 : index
      %c0_14 = arith.constant 0 : index
      %17 = vector.load %arg5[%c0_13, %c0_14] : memref<128x128xbf16, #tpu.memory_space<vmem>>, vector<128x128xbf16>
      %cst_15 = arith.constant dense<0.000000e+00> : vector<8x128xf32>
      %18 = tpu.matmul %16, %17, %cst_15 {dimension_numbers = #tpu.dot_dimension_numbers<[1], [0], [0], [1], [0, 0, 1, 1], [], []>} : vector<8x128xbf16>, vector<128x128xbf16>, vector<8x128xf32> -> vector<8x128xf32>
      %c0_16 = arith.constant 0 : index
      %c0_17 = arith.constant 0 : index
      %19 = vector.load %arg6[%c0_16, %c0_17] : memref<1x128xf32, #tpu.memory_space<vmem>>, vector<1x128xf32>
      %20 = vector.broadcast %19 : vector<1x128xf32> to vector<8x128xf32>
      %21 = arith.addf %18, %20 : vector<8x128xf32>
      %c0_18 = arith.constant 0 : index
      %c0_19 = arith.constant 0 : index
      %22 = vector.load %arg7[%c0_18, %c0_19] : memref<8x128xf32, #tpu.memory_space<vmem>>, vector<8x128xf32>
      tpu.vector_store %arg7[%c0_18, %c0_19], %21 {strides = array<i32>} : memref<8x128xf32, #tpu.memory_space<vmem>>, vector<8x128xf32>,
    } else {
    }
    return
  }
  func.func @transform_0(%arg0: i32, %arg1: i32) -> (i32, i32) {
    %c0_i32 = arith.constant 0 : i32
    return %arg0, %arg1 : i32, i32
  }
  func.func @transform_1(%arg0: i32, %arg1: i32) -> (i32, i32) {
    %c0_i32 = arith.constant 0 : i32
    %c0_i32_0 = arith.constant 0 : i32
    return %arg1, %c0_i32 : i32, i32
  }
  func.func @transform_2(%arg0: i32, %arg1: i32) -> (i32, i32) {
    %c0_i32 = arith.constant 0 : i32
    %c0_i32_0 = arith.constant 0 : i32
    %c0_i32_1 = arith.constant 0 : i32
    return %c0_i32, %c0_i32_0 : i32, i32
  }
  func.func @transform_3(%arg0: i32, %arg1: i32) -> (i32, i32) {
    %c0_i32 = arith.constant 0 : i32
    %c0_i32_0 = arith.constant 0 : i32
    %c0_i32_1 = arith.constant 0 : i32
    return %c0_i32, %c0_i32_0 : i32, i32
  }
  func.func @transform_4(%arg0: i32, %arg1: i32) -> (i32, i32) {
    %c0_i32 = arith.constant 0 : i32
    %c0_i32_0 = arith.constant 0 : i32
    %c0_i32_1 = arith.constant 0 : i32
    return %c0_i32, %c0_i32_0 : i32, i32
  }
  func.func @transform_5(%arg0: i32, %arg1: i32) -> (i32, i32) {
    %c0_i32 = arith.constant 0 : i32
    %c0_i32_0 = arith.constant 0 : i32
    return %arg0, %c0_i32 : i32, i32
  }
}

</mosaic_0001>

<llo_original>
// kernel: model_wrapper_forward.1
$region0: #{model_wrapper_forward.1}
  #allocation0 [shape = 'u32[]', space=smem, size = 0x4, offset = 0x4, fixed_abs, tag = 'smem constant byte address 0x4 - core index']
  #allocation1 [shape = 'u32[144,128]{1,0:T(1,128)}', space=vmem, size = 0x12000, scoped, tag = 'internal scratch']
  #allocation2 [shape = 'f32[8,128]{1,0:T(8,128)}', space=vmem, size = 0x1000, scoped, tag = 'scratch operand']
  %s0 = inlined_call_operand.vmem [shape: bf16[24,768], index: 0, kind: input, shape index: {}]
  %s1 = inlined_call_operand.vmem [shape: bf16[768,128], index: 1, kind: input, shape index: {}]
  %s2 = inlined_call_operand.vmem [shape: f32[1,128], index: 2, kind: input, shape index: {}]
  %s3 = inlined_call_operand.vmem [shape: bf16[128,128], index: 3, kind: input, shape index: {}]
  %s4 = inlined_call_operand.vmem [shape: f32[1,128], index: 4, kind: input, shape index: {}]
  %s5 = inlined_call_operand.vmem [shape: f32[24,128], index: 5, kind: output, shape index: {}]
  %s6 = sld [smem:[#allocation0]]
  $region61: #{model_wrapper_forward.1} parent=0
    _
  %s8 = ssub.s32 1, %s6
  %s9 = scalar_select 0, %s8, %s6
  loop: start=0, step=1, limit=11
  $region2: #{model_wrapper_forward.1} parent=0 // loop_pre_header
    _
  $region3: #{model_wrapper_forward.1} parent=0 // loop_header
    %s11 = sphi 0, %s15
    %p12 = scmp.ge.s32.totalorder %s11, 11
    %s18 = sphi 0, %s30
    %s19 = sphi 0, %s26
    %s20 = sphi 0, %s18
    %s21 = sphi 0, %s19
    %s22 = sphi 0, %s20
    %s23 = sphi 0, %s21
    %s35 = sphi 0, %s37
    %s38 = sphi 0, %s35
    %s39 = sphi 0, %s38
    %s55 = sphi 0, %s39
    %s61 = sphi 0, %s63
    %s64 = sphi 0, %s61
    %s65 = sphi 0, %s64
    %s81 = sphi 0, %s65
    %s85 = sphi 0, %s85
    %s87 = sphi 0, %s85
    %s88 = sphi 0, %s87
    %s102 = sphi 0, %s88
    %s106 = sphi 0, %s106
    %s108 = sphi 0, %s106
    %s109 = sphi 0, %s108
    %s123 = sphi 0, %s109
    %s127 = sphi 0, %s127
    %s129 = sphi 0, %s127
    %s130 = sphi 0, %s129
    %s144 = sphi 0, %s130
    %s150 = sphi 0, %s152
    %s153 = sphi 0, %s150
    %s154 = sphi 0, %s153
    %s170 = sphi 0, %s154
  $region4: #{model_wrapper_forward.1} parent=0 // loop_header_branch
    %14 = sbr.rel (%p12) target = $region8
  $region5: #{model_wrapper_forward.1} parent=0 // loop_body
    %s16 = ssub.s32 %s11, 1
    %s17 = ssub.s32 %s11, 2
    %s24 = sadd.s32 1, %s19
    %p25 = scmp.ge.s32.totalorder %s24, 3
    %s26 = scalar_select %p25, 0, %s24
    %s27 = sadd.s32 1, %s18
    %s28 = scalar_select %p25, %s27, %s18
    %p29 = scmp.ge.s32.totalorder %s28, 3
    %s30 = scalar_select %p29, 0, %s28
    %s31 = ssub.s32 %s18, %s30
    %s32 = ssub.s32 %s19, %s26
    %s33 = sor.u32 %s31, %s32
    %p34 = scmp.eq.s32.totalorder %s33, 0
    %s36 = sadd.s32 %s35, 1
    %s37 = scalar_select %p34, %s35, %s36
    %p40 = pneg %p34
    %p41 = scmp.eq.s32.totalorder %s11, 8
    %p42 = por %p40, %p41
    %p43 = scmp.ne.s32.totalorder %s35, %s38
    %p44 = scmp.eq.s32.totalorder %s11, 0
    %p45 = por %p43, %p44
    %p46 = scmp.ne.s32.totalorder %s35, %s38
    %p47 = scmp.eq.s32.totalorder %s16, 8
    %p48 = por %p46, %p47
    %p49 = scmp.ne.s32.totalorder %s38, %s39
    %p50 = scmp.eq.s32.totalorder %s16, 0
    %p51 = por %p49, %p50
    %p52 = scmp.ne.s32.totalorder %s38, %s39
    %p53 = scmp.eq.s32.totalorder %s17, 8
    %p54 = por %p52, %p53
    %p56 = scmp.ne.s32.totalorder %s39, %s55
    %p57 = scmp.eq.s32.totalorder %s17, 0
    %p58 = por %p56, %p57
    %s59 = ssub.s32 %s19, %s26
    %p60 = scmp.eq.s32.totalorder %s59, 0
    %s62 = sadd.s32 %s61, 1
    %s63 = scalar_select %p60, %s61, %s62
    %p66 = pneg %p60
    %p67 = scmp.eq.s32.totalorder %s11, 8
    %p68 = por %p66, %p67
    %p69 = scmp.ne.s32.totalorder %s61, %s64
    %p70 = scmp.eq.s32.totalorder %s11, 0
    %p71 = por %p69, %p70
    %p72 = scmp.ne.s32.totalorder %s61, %s64
    %p73 = scmp.eq.s32.totalorder %s16, 8
    %p74 = por %p72, %p73
    %p75 = scmp.ne.s32.totalorder %s64, %s65
    %p76 = scmp.eq.s32.totalorder %s16, 0
    %p77 = por %p75, %p76
    %p78 = scmp.ne.s32.totalorder %s64, %s65
    %p79 = scmp.eq.s32.totalorder %s17, 8
    %p80 = por %p78, %p79
    %p82 = scmp.ne.s32.totalorder %s65, %s81
    %p83 = scmp.eq.s32.totalorder %s17, 0
    %p84 = por %p82, %p83
    %s86 = sadd.s32 %s85, 1
    %p89 = scmp.eq.s32.totalorder %s11, 8
    %p90 = scmp.ne.s32.totalorder %s85, %s87
    %p91 = scmp.eq.s32.totalorder %s11, 0
    %p92 = por %p90, %p91
    %p93 = scmp.ne.s32.totalorder %s85, %s87
    %p94 = scmp.eq.s32.totalorder %s16, 8
    %p95 = por %p93, %p94
    %p96 = scmp.ne.s32.totalorder %s87, %s88
    %p97 = scmp.eq.s32.totalorder %s16, 0
    %p98 = por %p96, %p97
    %p99 = scmp.ne.s32.totalorder %s87, %s88
    %p100 = scmp.eq.s32.totalorder %s17, 8
    %p101 = por %p99, %p100
    %p103 = scmp.ne.s32.totalorder %s88, %s102
    %p104 = scmp.eq.s32.totalorder %s17, 0
    %p105 = por %p103, %p104
    %s107 = sadd.s32 %s106, 1
    %p110 = scmp.eq.s32.totalorder %s11, 8
    %p111 = scmp.ne.s32.totalorder %s106, %s108
    %p112 = scmp.eq.s32.totalorder %s11, 0
    %p113 = por %p111, %p112
    %p114 = scmp.ne.s32.totalorder %s106, %s108
    %p115 = scmp.eq.s32.totalorder %s16, 8
    %p116 = por %p114, %p115
    %p117 = scmp.ne.s32.totalorder %s108, %s109
    %p118 = scmp.eq.s32.totalorder %s16, 0
    %p119 = por %p117, %p118
    %p120 = scmp.ne.s32.totalorder %s108, %s109
    %p121 = scmp.eq.s32.totalorder %s17, 8
    %p122 = por %p120, %p121
    %p124 = scmp.ne.s32.totalorder %s109, %s123
    %p125 = scmp.eq.s32.totalorder %s17, 0
    %p126 = por %p124, %p125
    %s128 = sadd.s32 %s127, 1
    %p131 = scmp.eq.s32.totalorder %s11, 8
    %p132 = scmp.ne.s32.totalorder %s127, %s129
    %p133 = scmp.eq.s32.totalorder %s11, 0
    %p134 = por %p132, %p133
    %p135 = scmp.ne.s32.totalorder %s127, %s129
    %p136 = scmp.eq.s32.totalorder %s16, 8
    %p137 = por %p135, %p136
    %p138 = scmp.ne.s32.totalorder %s129, %s130
    %p139 = scmp.eq.s32.totalorder %s16, 0
    %p140 = por %p138, %p139
    %p141 = scmp.ne.s32.totalorder %s129, %s130
    %p142 = scmp.eq.s32.totalorder %s17, 8
    %p143 = por %p141, %p142
    %p145 = scmp.ne.s32.totalorder %s130, %s144
    %p146 = scmp.eq.s32.totalorder %s17, 0
    %p147 = por %p145, %p146
    %s148 = ssub.s32 %s18, %s30
    %p149 = scmp.eq.s32.totalorder %s148, 0
    %s151 = sadd.s32 %s150, 1
    %s152 = scalar_select %p149, %s150, %s151
    %p155 = pneg %p149
    %p156 = scmp.eq.s32.totalorder %s11, 8
    %p157 = por %p155, %p156
    %p158 = scmp.ne.s32.totalorder %s150, %s153
    %p159 = scmp.eq.s32.totalorder %s11, 0
    %p160 = por %p158, %p159
    %p161 = scmp.ne.s32.totalorder %s150, %s153
    %p162 = scmp.eq.s32.totalorder %s16, 8
    %p163 = por %p161, %p162
    %p164 = scmp.ne.s32.totalorder %s153, %s154
    %p165 = scmp.eq.s32.totalorder %s16, 0
    %p166 = por %p164, %p165
    %p167 = scmp.ne.s32.totalorder %s153, %s154
    %p168 = scmp.eq.s32.totalorder %s17, 8
    %p169 = por %p167, %p168
    %p171 = scmp.ne.s32.totalorder %s154, %s170
    %p172 = scmp.eq.s32.totalorder %s17, 0
    %p173 = por %p171, %p172
    %p174 = scmp.le.s32.totalorder 1, %s11
    %p175 = scmp.lt.s32.totalorder %s11, 10
    %p176 = pnand %p174, %p175
    %p177 = pneg %p176
    // Predicated region
    $region9: #{model_wrapper_forward.1} parent=5 // pred_check
      _
    $region10: #{model_wrapper_forward.1} parent=5 // pred_check_branch
      %179 = sbr.rel (%p176) target = $region12
    $region11: #{model_wrapper_forward.1} parent=5 // pred_region
      %s180 = ssub.s32 %s11, 1
      // Predicated region
      $region13: #{model_wrapper_forward.1} parent=11 // pred_check
        %p181 = pneg %p98
      $region14: #{model_wrapper_forward.1} parent=11 // pred_check_branch
        %183 = sbr.rel (%p181) target = $region16
      $region15: #{model_wrapper_forward.1} parent=11 // pred_region
        _
      $region16: #{model_wrapper_forward.1} parent=11 // pred_fallthru
        _
      // Predicated region
      $region17: #{model_wrapper_forward.1} parent=11 // pred_check
        %p184 = pneg %p119
      $region18: #{model_wrapper_forward.1} parent=11 // pred_check_branch
        %186 = sbr.rel (%p184) target = $region20
      $region19: #{model_wrapper_forward.1} parent=11 // pred_region
        _
      $region20: #{model_wrapper_forward.1} parent=11 // pred_fallthru
        _
      // Predicated region
      $region21: #{model_wrapper_forward.1} parent=11 // pred_check
        %p187 = pneg %p140
      $region22: #{model_wrapper_forward.1} parent=11 // pred_check_branch
        %189 = sbr.rel (%p187) target = $region24
      $region23: #{model_wrapper_forward.1} parent=11 // pred_region
        _
      $region24: #{model_wrapper_forward.1} parent=11 // pred_fallthru
        _
    $region12: #{model_wrapper_forward.1} parent=5 // pred_fallthru
      _
    %p190 = scmp.lt.s32.totalorder %s11, 9
    // Predicated region
    $region25: #{model_wrapper_forward.1} parent=5 // pred_check
      %p191 = pneg %p190
    $region26: #{model_wrapper_forward.1} parent=5 // pred_check_branch
      %193 = sbr.rel (%p191) target = $region28
    $region27: #{model_wrapper_forward.1} parent=5 // pred_region
      // Predicated region
      $region29: #{model_wrapper_forward.1} parent=27 // pred_check
        %p194 = pneg %p45
      $region30: #{model_wrapper_forward.1} parent=27 // pred_check_branch
        %196 = sbr.rel (%p194) target = $region32
      $region31: #{model_wrapper_forward.1} parent=27 // pred_region
        %s197 = smul.u32 2, %s19
        %p198 = scmp.lt.s32.totalorder %s18, 2
        %s199 = scalar_select %p198, %s18, 2
        %p200 = scmp.lt.s32.totalorder %s197, 5
        %s201 = scalar_select %p200, %s197, 5
        %s202 = smul.addr %s199, 6
        %s203 = sadd.s32 %s201, %s202
        %s204 = smul.addr %s203, 4
        %s205 = scalar_lea.vmem %s0, %s204
        %s206 = smul.u32 2, %s19
      $region32: #{model_wrapper_forward.1} parent=27 // pred_fallthru
        _
      // Predicated region
      $region33: #{model_wrapper_forward.1} parent=27 // pred_check
        %p207 = pneg %p71
      $region34: #{model_wrapper_forward.1} parent=27 // pred_check_branch
        %209 = sbr.rel (%p207) target = $region36
      $region35: #{model_wrapper_forward.1} parent=27 // pred_region
        %s210 = smul.u32 32, %s19
        %p211 = scmp.lt.s32.totalorder %s210, 95
        %s212 = scalar_select %p211, %s210, 95
        %s213 = smul.addr %s212, 4
        %s214 = scalar_lea.vmem %s1, %s213
        %s215 = smul.u32 32, %s19
      $region36: #{model_wrapper_forward.1} parent=27 // pred_fallthru
        _
    $region28: #{model_wrapper_forward.1} parent=5 // pred_fallthru
      _
    %p216 = scmp.le.s32.totalorder 1, %s11
    %p217 = scmp.lt.s32.totalorder %s11, 10
    %p218 = pnand %p216, %p217
    %p219 = pneg %p218
    // Predicated region
    $region37: #{model_wrapper_forward.1} parent=5 // pred_check
      _
    $region38: #{model_wrapper_forward.1} parent=5 // pred_check_branch
      %221 = sbr.rel (%p218) target = $region40
    $region39: #{model_wrapper_forward.1} parent=5 // pred_region
      %s222 = ssub.s32 %s11, 1
      %s223 = smul.u32 2, %s21
      %p224 = scmp.lt.s32.totalorder %s20, 2
      %s225 = scalar_select %p224, %s20, 2
      %p226 = scmp.lt.s32.totalorder %s223, 5
      %s227 = scalar_select %p226, %s223, 5
      %s228 = smul.addr %s225, 6
      %s229 = sadd.s32 %s227, %s228
      %s230 = smul.addr %s229, 4
      %s231 = scalar_lea.vmem %s0, %s230
      %p232 = pneg %p51
      %p233 = pneg %p48
      %s234 = smul.u32 32, %s21
      %p235 = scmp.lt.s32.totalorder %s234, 95
      %s236 = scalar_select %p235, %s234, 95
      %s237 = smul.addr %s236, 4
      %s238 = scalar_lea.vmem %s1, %s237
      %p239 = pneg %p77
      %p240 = pneg %p74
      %p241 = pneg %p98
      %p242 = pneg %p95
      %p243 = pneg %p119
      %p244 = pneg %p116
      %p245 = pneg %p140
      %p246 = pneg %p137
      %p247 = pneg %p166
      %p248 = pneg %p163
      %p249 = scmp.lt.s32.totalorder %s20, 2
      %s250 = scalar_select %p249, %s20, 2
      %s251 = smul.addr %s250, 8
      %s252 = scalar_lea.vmem %s5, %s251
      %s253 = smul.u32 2, %s21
      %p254 = scmp.lt.s32.totalorder %s20, 2
      %s255 = scalar_select %p254, %s20, 2
      %p256 = scmp.lt.s32.totalorder %s253, 5
      %s257 = scalar_select %p256, %s253, 5
      %s258 = smul.addr %s255, 6
      %s259 = sadd.s32 %s257, %s258
      %s260 = smul.addr %s259, 4
      %s261 = scalar_lea.vmem %s0, %s260
      %s262 = smul.u32 2, %s21
      %s263 = smul.u32 32, %s21
      %p264 = scmp.lt.s32.totalorder %s263, 95
      %s265 = scalar_select %p264, %s263, 95
      %s266 = smul.addr %s265, 4
      %s267 = scalar_lea.vmem %s1, %s266
      %s268 = smul.u32 32, %s21
      %p269 = scmp.lt.s32.totalorder %s20, 2
      %s270 = scalar_select %p269, %s20, 2
      %s271 = smul.addr %s270, 8
      %s272 = scalar_lea.vmem %s5, %s271
      %p274 = scmp.eq.s32.totalorder %s21, 0
      // Predicated region
      $region41: #{model_wrapper_forward.1} parent=39 // pred_check
        %p275 = pneg %p274
      $region42: #{model_wrapper_forward.1} parent=39 // pred_check_branch
        %277 = sbr.rel (%p275) target = $region44
      $region43: #{model_wrapper_forward.1} parent=39 // pred_region
        %278 = vst [vmem:[#allocation2] sm:$0xff] 0.0
      $region44: #{model_wrapper_forward.1} parent=39 // pred_fallthru
        _
      %v279 = vld [vmem:[#allocation2] sm:$0xff]
      %v280 = vld [vmem:[%s261] sm:$0xff]
      %v281 = vld [vmem:[%s267] sm:$0xf]
      %v282 = vld [vmem:[%s267 + $0x4] sm:$0xf]
      %v283 = vld [vmem:[%s267 + $0x8] sm:$0xf]
      %v284 = vld [vmem:[%s267 + $0xc] sm:$0xf]
      %v285 = vld [vmem:[%s267 + $0x10] sm:$0xf]
      %v286 = vld [vmem:[%s267 + $0x14] sm:$0xf]
      %v287 = vld [vmem:[%s267 + $0x18] sm:$0xf]
      %v288 = vld [vmem:[%s267 + $0x1c] sm:$0xf]
      %v289 = vld [vmem:[%s267 + $0x20] sm:$0xf]
      %v290 = vld [vmem:[%s267 + $0x24] sm:$0xf]
      %v291 = vld [vmem:[%s267 + $0x28] sm:$0xf]
      %v292 = vld [vmem:[%s267 + $0x2c] sm:$0xf]
      %v293 = vld [vmem:[%s267 + $0x30] sm:$0xf]
      %v294 = vld [vmem:[%s267 + $0x34] sm:$0xf]
      %v295 = vld [vmem:[%s267 + $0x38] sm:$0xf]
      %v296 = vld [vmem:[%s267 + $0x3c] sm:$0xf]
      %v297 = vld [vmem:[%s267 + $0x40] sm:$0xf]
      %v298 = vld [vmem:[%s267 + $0x44] sm:$0xf]
      %v299 = vld [vmem:[%s267 + $0x48] sm:$0xf]
      %v300 = vld [vmem:[%s267 + $0x4c] sm:$0xf]
      %v301 = vld [vmem:[%s267 + $0x50] sm:$0xf]
      %v302 = vld [vmem:[%s267 + $0x54] sm:$0xf]
      %v303 = vld [vmem:[%s267 + $0x58] sm:$0xf]
      %v304 = vld [vmem:[%s267 + $0x5c] sm:$0xf]
      %v305 = vld [vmem:[%s267 + $0x60] sm:$0xf]
      %v306 = vld [vmem:[%s267 + $0x64] sm:$0xf]
      %v307 = vld [vmem:[%s267 + $0x68] sm:$0xf]
      %v308 = vld [vmem:[%s267 + $0x6c] sm:$0xf]
      %v309 = vld [vmem:[%s267 + $0x70] sm:$0xf]
      %v310 = vld [vmem:[%s267 + $0x74] sm:$0xf]
      %v311 = vld [vmem:[%s267 + $0x78] sm:$0xf]
      %v312 = vld [vmem:[%s267 + $0x7c] sm:$0xf]
      %v314 = vunpack.c.l.b16 %v280
      %v315 = vunpack.c.h.b16 %v280
      %v316 = vpack.c.b16 %v314, %v314
      %v317 = vpack.c.b16 %v315, %v315
      %v352 = vunpack.c.l.b16 %v281
      %v353 = vunpack.c.l.b16 %v282
      %v354 = vunpack.c.l.b16 %v283
      %v355 = vunpack.c.l.b16 %v284
      %v356 = vunpack.c.l.b16 %v285
      %v357 = vunpack.c.l.b16 %v286
      %v358 = vunpack.c.l.b16 %v287
      %v359 = vunpack.c.l.b16 %v288
      %v360 = vunpack.c.l.b16 %v289
      %v361 = vunpack.c.l.b16 %v290
      %v362 = vunpack.c.l.b16 %v291
      %v363 = vunpack.c.l.b16 %v292
      %v364 = vunpack.c.l.b16 %v293
      %v365 = vunpack.c.l.b16 %v294
      %v366 = vunpack.c.l.b16 %v295
      %v367 = vunpack.c.l.b16 %v296
      %v368 = vunpack.c.l.b16 %v297
      %v369 = vunpack.c.l.b16 %v298
      %v370 = vunpack.c.l.b16 %v299
      %v371 = vunpack.c.l.b16 %v300
      %v372 = vunpack.c.l.b16 %v301
      %v373 = vunpack.c.l.b16 %v302
      %v374 = vunpack.c.l.b16 %v303
      %v375 = vunpack.c.l.b16 %v304
      %v376 = vunpack.c.l.b16 %v305
      %v377 = vunpack.c.l.b16 %v306
      %v378 = vunpack.c.l.b16 %v307
      %v379 = vunpack.c.l.b16 %v308
      %v380 = vunpack.c.l.b16 %v309
      %v381 = vunpack.c.l.b16 %v310
      %v382 = vunpack.c.l.b16 %v311
      %v383 = vunpack.c.l.b16 %v312
      %v384 = vpack.c.b16 %v353, %v352
      %v385 = vpack.c.b16 %v355, %v354
      %v386 = vpack.c.b16 %v357, %v356
      %v387 = vpack.c.b16 %v359, %v358
      %v388 = vpack.c.b16 %v361, %v360
      %v389 = vpack.c.b16 %v363, %v362
      %v390 = vpack.c.b16 %v365, %v364
      %v391 = vpack.c.b16 %v367, %v366
      %v392 = vpack.c.b16 %v369, %v368
      %v393 = vpack.c.b16 %v371, %v370
      %v394 = vpack.c.b16 %v373, %v372
      %v395 = vpack.c.b16 %v375, %v374
      %v396 = vpack.c.b16 %v377, %v376
      %v397 = vpack.c.b16 %v379, %v378
      %v398 = vpack.c.b16 %v381, %v380
      %v399 = vpack.c.b16 %v383, %v382
      %416 = vmatprep.subr.bf16.mxu0 0
      %417 = vmatpush1.bf16.msra.mxu0 %v391
      %418 = vmatprep.subr.bf16.mxu0 0
      %419 = vmatpush1.bf16.msra.mxu0 %v390
      %420 = vmatprep.subr.bf16.mxu0 0
      %421 = vmatpush1.bf16.msra.mxu0 %v389
      %422 = vmatprep.subr.bf16.mxu0 0
      %423 = vmatpush1.bf16.msra.mxu0 %v388
      %424 = vmatprep.subr.bf16.mxu0 0
      %425 = vmatpush1.bf16.msra.mxu0 %v387
      %426 = vmatprep.subr.bf16.mxu0 0
      %427 = vmatpush1.bf16.msra.mxu0 %v386
      %428 = vmatprep.subr.bf16.mxu0 0
      %429 = vmatpush1.bf16.msra.mxu0 %v385
      %430 = vmatprep.subr.bf16.mxu0 0
      %431 = vmatpush1.bf16.msra.mxu0 %v384
      %432 = vmatprep.subr.bf16.mxu0 0
      %433 = vmatpush2.bf16.msra.mxu0 %v399
      %434 = vmatprep.subr.bf16.mxu0 0
      %435 = vmatpush2.bf16.msra.mxu0 %v398
      %436 = vmatprep.subr.bf16.mxu0 0
      %437 = vmatpush2.bf16.msra.mxu0 %v397
      %438 = vmatprep.subr.bf16.mxu0 0
      %439 = vmatpush2.bf16.msra.mxu0 %v396
      %440 = vmatprep.subr.bf16.mxu0 0
      %441 = vmatpush2.bf16.msra.mxu0 %v395
      %442 = vmatprep.subr.bf16.mxu0 0
      %443 = vmatpush2.bf16.msra.mxu0 %v394
      %444 = vmatprep.subr.bf16.mxu0 0
      %445 = vmatpush2.bf16.msra.mxu0 %v393
      %446 = vmatprep.subr.bf16.mxu0 0
      %447 = vmatpush2.bf16.msra.mxu0 %v392
      %448 = vmatprep.mubr.bf16.mxu0 %v317
      %449 = vmatmul.mubr.bf16.gmra.mxu0 %v316
      %v450 = vpop.f32.mrf.mxu0
      %v451 = vadd.f32 0.0, %v450
      %v452 = vpop.f32.mrf.mxu0
      %v453 = vpop.f32.mrf.mxu0
      %v454 = vpop.f32.mrf.mxu0
      %455 = vdwg.mxu0
      %v456 = vadd.f32 %v279, %v451
      %457 = vst [vmem:[#allocation2] sm:$0xff] %v456
      %p458 = scmp.eq.s32.totalorder %s21, 2
      // Predicated region
      $region45: #{model_wrapper_forward.1} parent=39 // pred_check
        %p459 = pneg %p458
      $region46: #{model_wrapper_forward.1} parent=39 // pred_check_branch
        %461 = sbr.rel (%p459) target = $region48
      $region47: #{model_wrapper_forward.1} parent=39 // pred_region
        %v462 = vld [vmem:[#allocation2] sm:$0xff]
        %v463 = vld [vmem:[%s2] sm:$0x1]
        %v465 = vlaneseq
        %v466 = vshrl.u32 %v465, 7
        %v467 = vsub.s32 0, %v466
        %v468 = vrot.slane %v463, %v467
        %v470 = vadd.f32 %v462, %v468
        %v471 = vpack.c.bf16 %v470, %v470
        %v472 = vld [vmem:[%s3] sm:$0xf]
        %v473 = vld [vmem:[%s3 + $0x4] sm:$0xf]
        %v474 = vld [vmem:[%s3 + $0x8] sm:$0xf]
        %v475 = vld [vmem:[%s3 + $0xc] sm:$0xf]
        %v476 = vld [vmem:[%s3 + $0x10] sm:$0xf]
        %v477 = vld [vmem:[%s3 + $0x14] sm:$0xf]
        %v478 = vld [vmem:[%s3 + $0x18] sm:$0xf]
        %v479 = vld [vmem:[%s3 + $0x1c] sm:$0xf]
        %v480 = vld [vmem:[%s3 + $0x20] sm:$0xf]
        %v481 = vld [vmem:[%s3 + $0x24] sm:$0xf]
        %v482 = vld [vmem:[%s3 + $0x28] sm:$0xf]
        %v483 = vld [vmem:[%s3 + $0x2c] sm:$0xf]
        %v484 = vld [vmem:[%s3 + $0x30] sm:$0xf]
        %v485 = vld [vmem:[%s3 + $0x34] sm:$0xf]
        %v486 = vld [vmem:[%s3 + $0x38] sm:$0xf]
        %v487 = vld [vmem:[%s3 + $0x3c] sm:$0xf]
        %v488 = vld [vmem:[%s4] sm:$0x1]
        %v490 = vlaneseq
        %v491 = vshrl.u32 %v490, 7
        %v492 = vsub.s32 0, %v491
        %v493 = vrot.slane %v488, %v492
        %v511 = vunpack.c.l.b16 %v472
        %v512 = vunpack.c.l.b16 %v473
        %v513 = vunpack.c.l.b16 %v474
        %v514 = vunpack.c.l.b16 %v475
        %v515 = vunpack.c.l.b16 %v476
        %v516 = vunpack.c.l.b16 %v477
        %v517 = vunpack.c.l.b16 %v478
        %v518 = vunpack.c.l.b16 %v479
        %v519 = vunpack.c.l.b16 %v480
        %v520 = vunpack.c.l.b16 %v481
        %v521 = vunpack.c.l.b16 %v482
        %v522 = vunpack.c.l.b16 %v483
        %v523 = vunpack.c.l.b16 %v484
        %v524 = vunpack.c.l.b16 %v485
        %v525 = vunpack.c.l.b16 %v486
        %v526 = vunpack.c.l.b16 %v487
        %v527 = vpack.c.b16 %v512, %v511
        %v528 = vpack.c.b16 %v514, %v513
        %v529 = vpack.c.b16 %v516, %v515
        %v530 = vpack.c.b16 %v518, %v517
        %v531 = vpack.c.b16 %v520, %v519
        %v532 = vpack.c.b16 %v522, %v521
        %v533 = vpack.c.b16 %v524, %v523
        %v534 = vpack.c.b16 %v526, %v525
        %543 = vmatprep.subr.bf16.mxu0 0
        %544 = vmatpush1.bf16.msra.mxu0 %v534
        %545 = vmatprep.subr.bf16.mxu0 0
        %546 = vmatpush1.bf16.msra.mxu0 %v533
        %547 = vmatprep.subr.bf16.mxu0 0
        %548 = vmatpush1.bf16.msra.mxu0 %v532
        %549 = vmatprep.subr.bf16.mxu0 0
        %550 = vmatpush1.bf16.msra.mxu0 %v531
        %551 = vmatprep.subr.bf16.mxu0 0
        %552 = vmatpush1.bf16.msra.mxu0 %v530
        %553 = vmatprep.subr.bf16.mxu0 0
        %554 = vmatpush1.bf16.msra.mxu0 %v529
        %555 = vmatprep.subr.bf16.mxu0 0
        %556 = vmatpush1.bf16.msra.mxu0 %v528
        %557 = vmatprep.subr.bf16.mxu0 0
        %558 = vmatpush1.bf16.msra.mxu0 %v527
        %559 = vmatprep.subr.bf16.mxu0 0
        %560 = vmatpush2.bf16.msra.mxu0 0
        %561 = vmatprep.subr.bf16.mxu0 0
        %562 = vmatpush2.bf16.msra.mxu0 0
        %563 = vmatprep.subr.bf16.mxu0 0
        %564 = vmatpush2.bf16.msra.mxu0 0
        %565 = vmatprep.subr.bf16.mxu0 0
        %566 = vmatpush2.bf16.msra.mxu0 0
        %567 = vmatprep.subr.bf16.mxu0 0
        %568 = vmatpush2.bf16.msra.mxu0 0
        %569 = vmatprep.subr.bf16.mxu0 0
        %570 = vmatpush2.bf16.msra.mxu0 0
        %571 = vmatprep.subr.bf16.mxu0 0
        %572 = vmatpush2.bf16.msra.mxu0 0
        %573 = vmatprep.subr.bf16.mxu0 0
        %574 = vmatpush2.bf16.msra.mxu0 0
        %575 = vmatprep.mubr.bf16.mxu0 0
        %576 = vmatmul.mubr.bf16.gmra.mxu0 %v471
        %v577 = vpop.f32.mrf.mxu0
        %v578 = vadd.f32 %v493, %v577
        %v579 = vpop.f32.mrf.mxu0
        %v580 = vpop.f32.mrf.mxu0
        %v581 = vpop.f32.mrf.mxu0
        %582 = vdwg.mxu0
        %583 = vst [vmem:[%s272] sm:$0xff] %v578
      $region48: #{model_wrapper_forward.1} parent=39 // pred_fallthru
        _
      %p584 = scmp.lt.s32.totalorder %s20, 2
      %s585 = scalar_select %p584, %s20, 2
      %s586 = smul.addr %s585, 8
      %s587 = scalar_lea.vmem %s5, %s586
      // Predicated region
      $region49: #{model_wrapper_forward.1} parent=39 // pred_check
        %p588 = pneg %p163
      $region50: #{model_wrapper_forward.1} parent=39 // pred_check_branch
        %590 = sbr.rel (%p588) target = $region52
      $region51: #{model_wrapper_forward.1} parent=39 // pred_region
        _
      $region52: #{model_wrapper_forward.1} parent=39 // pred_fallthru
        _
    $region40: #{model_wrapper_forward.1} parent=5 // pred_fallthru
      _
    %p591 = scmp.le.s32.totalorder 2, %s11
    // Predicated region
    $region53: #{model_wrapper_forward.1} parent=5 // pred_check
      %p592 = pneg %p591
    $region54: #{model_wrapper_forward.1} parent=5 // pred_check_branch
      %594 = sbr.rel (%p592) target = $region56
    $region55: #{model_wrapper_forward.1} parent=5 // pred_region
      %s595 = ssub.s32 %s11, 2
      // Predicated region
      $region57: #{model_wrapper_forward.1} parent=55 // pred_check
        %p596 = pneg %p169
      $region58: #{model_wrapper_forward.1} parent=55 // pred_check_branch
        %598 = sbr.rel (%p596) target = $region60
      $region59: #{model_wrapper_forward.1} parent=55 // pred_region
        %p599 = scmp.lt.s32.totalorder %s22, 2
        %s600 = scalar_select %p599, %s22, 2
        %s601 = smul.addr %s600, 8
        %s602 = scalar_lea.vmem %s5, %s601
      $region60: #{model_wrapper_forward.1} parent=55 // pred_fallthru
        _
    $region56: #{model_wrapper_forward.1} parent=5 // pred_fallthru
      _
  $region6: #{model_wrapper_forward.1} parent=0 // loop_footer
    %s15 = sadd.s32 1, %s11
  $region7: #{model_wrapper_forward.1} parent=0 // loop_footer_branch
    %10 = sbr.rel target = $region3
  $region8: #{model_wrapper_forward.1} parent=0 // loop_exit
    _

</llo_original>
